<compile_context>
chip_gen: v7x
topology: tpu7x:2x2x1
jax: 0.10.0
libtpu: 0.0.40
codegen_flags: <defaults>
</compile_context>

<pallas_src>
import math
from functools import partial

import numpy as np
import jax
import jax.numpy as jnp
from jax.experimental import pallas as pl
from jax.experimental.pallas import tpu as pltpu

B = 2              # batch
MAX_SEQ_LEN = 8    # L
LATENT_DIM = 32    # D (diffusion_model.latent_dim)
HIDDEN = 64        # H of the synthetic diffusion model
TIMESTEPS = 1000
LANE = 128         # TPU lane width; D and H are padded up to a multiple of this
NCOEF = 8          # packed per-row coefficient columns (5 used, padded to 8 sublane-friendly)


# ------------------------------------------------------------------ schedule
def cosine_beta_schedule(timesteps, s=0.008):
    steps = timesteps + 1
    x = np.linspace(0, timesteps, steps, dtype=np.float64)
    ac = np.cos((x / timesteps + s) / (1 + s) * math.pi * 0.5) ** 2
    ac = ac / ac[0]
    betas = 1 - ac[1:] / ac[:-1]
    return np.clip(betas, 0, 0.999)


def make_diffusion_buffers(timesteps=TIMESTEPS):
    betas = cosine_beta_schedule(timesteps)
    alphas = 1.0 - betas
    ac = np.cumprod(alphas)
    return dict(
        sqrt_alphas_cumprod=np.sqrt(ac).astype(np.float32),
        sqrt_one_minus_alphas_cumprod=np.sqrt(1.0 - ac).astype(np.float32),
        sqrt_recip_alphas_cumprod=np.sqrt(1.0 / ac).astype(np.float32),
        sqrt_recipm1_alphas_cumprod=np.sqrt(1.0 / ac - 1.0).astype(np.float32),
    )


# ------------------------------------------------------------------- kernel
def gaussian_diffusion_kernel(coef_ref, x0_ref, noise_ref,
                              w1_ref, bias1_ref, w2_ref, b2_ref,
                              loss_ref, pred_noise_ref, pred_x0_ref,
                              *, num_batches, seq_len):
    coef = coef_ref[...]                   # (B*L, 8) packed per-row coefficients
    ca    = coef[:, 0:1]                   # sqrt(alphas_cumprod)[t]
    cb    = coef[:, 1:2]                   # sqrt(1 - alphas_cumprod)[t]
    cr    = coef[:, 2:3]                   # sqrt(1 / alphas_cumprod)[t]
    crm1  = coef[:, 3:4]                   # sqrt(1 / alphas_cumprod - 1)[t]
    wmask = coef[:, 4:5]                   # valid(row) / (len(b) * D)

    x0 = x0_ref[...]                       # (B*L, Dp), zero-padded past LATENT_DIM
    nz = noise_ref[...]                    # (B*L, Dp)

    # (1) q_sample:  x_t = sqrt(ac_t)*x0 + sqrt(1-ac_t)*eps
    x_t = ca * x0 + cb * nz

    # (2) diffusion model, objective='pred_noise'
    # TODO(synk): the real diffusion_model is an external transformer; stand-in is a
    # deterministic time-conditioned 2-layer MLP so the GEMM hot path runs on the MXU.
    h = jnp.tanh(jnp.dot(x_t, w1_ref[...], preferred_element_type=jnp.float32)
                 + bias1_ref[...])                        # bias already carries t-conditioning
    pred_noise = (jnp.dot(h, w2_ref[...], preferred_element_type=jnp.float32)
                  + b2_ref[...])

    # (3) predict_start_from_noise
    pred_x0 = cr * x_t - crm1 * pred_noise

    # (4) masked L1, per-batch mean over the first sum(mask[b]) rows x D channels.
    #     Padded lanes are exactly zero in both pred_x0 and x0, so they
    #     contribute nothing to the sum.
    l1w = jnp.abs(pred_x0 - x0) * wmask
    for b in range(num_batches):                          # static, tiny (B=2)
        loss_ref[b] = jnp.sum(l1w[b * seq_len:(b + 1) * seq_len, :])

    pred_noise_ref[...] = pred_noise                      # unmasked 128-lane stores
    pred_x0_ref[...] = pred_x0


# ------------------------------------------------------------------ wrapper
def gaussian_diffusion_forward(x_start, mask_bool, t, noise, params, bufs):
    """Returns (loss[B,1], ModelPrediction-like tuple (pred_noise, pred_x_start, None))."""
    Bb, L, D = x_start.shape
    H = params["w1"].shape[1]
    BL = Bb * L
    DP = ((D + LANE - 1) // LANE) * LANE   # lane-dense padded latent dim
    HP = ((H + LANE - 1) // LANE) * LANE   # lane-dense padded hidden dim

    # per-timestep coefficients, expanded to per-row (B*L,) columns
    def per_row(v):
        return jnp.repeat(v.astype(jnp.float32), L)       # (B*L,)

    ca   = per_row(bufs["sqrt_alphas_cumprod"][t])
    cb   = per_row(bufs["sqrt_one_minus_alphas_cumprod"][t])
    cr   = per_row(bufs["sqrt_recip_alphas_cumprod"][t])
    crm1 = per_row(bufs["sqrt_recipm1_alphas_cumprod"][t])

    # loss weights: row valid (row index < sum(mask[b])) / (len(b) * D)
    length = jnp.sum(mask_bool, axis=-1).astype(jnp.float32)            # (B,)
    inv_cnt = 1.0 / (length * float(D))                                 # (B,)
    row_valid = (jnp.arange(L)[None, :] < length[:, None]).astype(jnp.float32)
    wmask = (row_valid * inv_cnt[:, None]).reshape(BL)                  # (B*L,)

    # pack the 5 per-row coefficient columns into one (B*L, NCOEF) block
    coef = jnp.zeros((BL, NCOEF), jnp.float32)
    coef = coef.at[:, 0].set(ca).at[:, 1].set(cb).at[:, 2].set(cr) \
               .at[:, 3].set(crm1).at[:, 4].set(wmask)

    # fold time conditioning into a per-row bias: b1 + (t/T) * tw  -> (B*L, H)
    t_norm = t.astype(jnp.float32) / float(TIMESTEPS)                   # (B,)
    bias1 = params["b1"] + t_norm[:, None] * params["tw"]               # (B, H)
    bias1_rows = jnp.repeat(bias1, L, axis=0)                           # (B*L, H)

    def pad2(a, rows, cols):
        return jnp.pad(a, ((0, rows - a.shape[0]), (0, cols - a.shape[1])))

    x0p = pad2(x_start.reshape(BL, D).astype(jnp.float32), BL, DP)      # (B*L, DP)
    nzp = pad2(noise.reshape(BL, D).astype(jnp.float32),   BL, DP)      # (B*L, DP)
    w1p = pad2(params["w1"], DP, HP)                                    # (DP, HP)
    b1p = pad2(bias1_rows,   BL, HP)                                    # (B*L, HP)
    w2p = pad2(params["w2"], HP, DP)                                    # (HP, DP)
    b2p = pad2(params["b2"], 1,  DP)                                    # (1, DP)

    out_shapes = (
        jax.ShapeDtypeStruct((Bb,), jnp.float32),        # per-batch loss (SMEM)
        jax.ShapeDtypeStruct((BL, DP), jnp.float32),     # pred_noise (lane-dense)
        jax.ShapeDtypeStruct((BL, DP), jnp.float32),     # pred_x_start (lane-dense)
    )

    loss, pn_p, px0_p = pl.pallas_call(
        partial(gaussian_diffusion_kernel, num_batches=Bb, seq_len=L),
        out_shape=out_shapes,
        in_specs=[pl.BlockSpec(memory_space=pltpu.MemorySpace.VMEM)] * 7,
        out_specs=(
            pl.BlockSpec(memory_space=pltpu.MemorySpace.SMEM),
            pl.BlockSpec(memory_space=pltpu.MemorySpace.VMEM),
            pl.BlockSpec(memory_space=pltpu.MemorySpace.VMEM),
        ),
    )(coef, x0p, nzp, w1p, b1p, w2p, b2p)

    pred_noise = pn_p[:, :D].reshape(Bb, L, D)
    pred_x0 = px0_p[:, :D].reshape(Bb, L, D)

    # ModelPrediction = (pred_noise, pred_x_start, encoded_audio=None)
    return loss[:, None], (pred_noise, pred_x0, None)


# ------------------------------------------------------- pure-JAX reference
def reference_forward(x_start, mask_bool, t, noise, params, bufs):
    Bb, L, D = x_start.shape
    e = lambda a: a[t][:, None, None]
    x_t = e(bufs["sqrt_alphas_cumprod"]) * x_start \
        + e(bufs["sqrt_one_minus_alphas_cumprod"]) * noise
    t_norm = (t.astype(jnp.float32) / float(TIMESTEPS))[:, None, None]
    h = jnp.tanh(x_t @ params["w1"] + params["b1"] + t_norm * params["tw"])
    pred_noise = h @ params["w2"] + params["b2"]
    pred_x0 = e(bufs["sqrt_recip_alphas_cumprod"]) * x_t \
            - e(bufs["sqrt_recipm1_alphas_cumprod"]) * pred_noise
    length = jnp.sum(mask_bool, axis=-1).astype(jnp.float32)            # (B,)
    valid = (jnp.arange(L)[None, :, None] < length[:, None, None])
    l1 = jnp.abs(pred_x0 - x_start) * valid.astype(jnp.float32)
    loss = jnp.sum(l1, axis=(1, 2)) / (length * float(D))
    return loss[:, None], pred_noise, pred_x0


# -------------------------------------------------------------------- main
if __name__ == "__main__":
    key = jax.random.PRNGKey(0)
    k_x, k_t, k_n, k_w1, k_tw, k_w2 = jax.random.split(key, 6)

    txt_latent = jax.random.normal(k_x, (B, MAX_SEQ_LEN, LATENT_DIM), jnp.float32)
    noise = jax.random.normal(k_n, (B, MAX_SEQ_LEN, LATENT_DIM), jnp.float32)
    # forward() samples t ~ Uniform[0, num_timesteps); done here with JAX PRNG
    t = jax.random.randint(k_t, (B,), 0, TIMESTEPS, dtype=jnp.int32)
    # prefix-True masks, as built from sentence lengths in the PyTorch code
    lengths = jnp.array([MAX_SEQ_LEN, MAX_SEQ_LEN // 2], dtype=jnp.int32)
    mask = jnp.arange(MAX_SEQ_LEN)[None, :] < lengths[:, None]          # (B, L) bool

    params = dict(
        w1=(0.1 * jax.random.normal(k_w1, (LATENT_DIM, HIDDEN))).astype(jnp.float32),
        b1=jnp.zeros((1, HIDDEN), jnp.float32),
        tw=(0.1 * jax.random.normal(k_tw, (1, HIDDEN))).astype(jnp.float32),
        w2=(0.1 * jax.random.normal(k_w2, (HIDDEN, LATENT_DIM))).astype(jnp.float32),
        b2=jnp.zeros((1, LATENT_DIM), jnp.float32),
    )
    bufs = {k: jnp.asarray(v) for k, v in make_diffusion_buffers().items()}

    loss, (pred_noise, pred_x0, _) = gaussian_diffusion_forward(
        txt_latent, mask, t, noise, params, bufs)
    jax.block_until_ready((loss, pred_noise, pred_x0))

    # correctness check vs plain-JAX reference (scale-aware tolerance)
    ref_loss, ref_pn, ref_px0 = reference_forward(
        txt_latent, mask, t, noise, params, bufs)
    for got, want in ((loss, ref_loss), (pred_noise, ref_pn), (pred_x0, ref_px0)):
        scale = float(np.max(np.abs(np.asarray(want)))) + 1.0
        np.testing.assert_allclose(np.asarray(got), np.asarray(want),
                                   rtol=1e-3, atol=1e-3 * scale)

    print("KERNEL_OK")
</pallas_src>

<mosaic_0001>
module attributes {stable_mosaic.version = 11 : i64} {
  func.func @gaussian_diffusion_kernel(%arg0: memref<16x8xf32, #tpu.memory_space<vmem>>, %arg1: memref<16x128xf32, #tpu.memory_space<vmem>>, %arg2: memref<16x128xf32, #tpu.memory_space<vmem>>, %arg3: memref<128x128xf32, #tpu.memory_space<vmem>>, %arg4: memref<16x128xf32, #tpu.memory_space<vmem>>, %arg5: memref<128x128xf32, #tpu.memory_space<vmem>>, %arg6: memref<1x128xf32, #tpu.memory_space<vmem>>, %arg7: memref<2xf32, #tpu.memory_space<smem>>, %arg8: memref<16x128xf32, #tpu.memory_space<vmem>>, %arg9: memref<16x128xf32, #tpu.memory_space<vmem>>) attributes {dimension_semantics = [], scalar_prefetch = 0 : i64, scratch_operands = 0 : i64, tpu.core_type = #tpu.core_type<tc>} {
    %c0 = arith.constant 0 : index
    %c0_0 = arith.constant 0 : index
    %0 = vector.load %arg0[%c0, %c0_0] : memref<16x8xf32, #tpu.memory_space<vmem>>, vector<16x8xf32>
    %1 = vector.extract_strided_slice %0 {offsets = [0, 0], sizes = [16, 1], strides = [1, 1]} : vector<16x8xf32> to vector<16x1xf32>
    %2 = vector.extract_strided_slice %0 {offsets = [0, 1], sizes = [16, 1], strides = [1, 1]} : vector<16x8xf32> to vector<16x1xf32>
    %3 = vector.extract_strided_slice %0 {offsets = [0, 2], sizes = [16, 1], strides = [1, 1]} : vector<16x8xf32> to vector<16x1xf32>
    %4 = vector.extract_strided_slice %0 {offsets = [0, 3], sizes = [16, 1], strides = [1, 1]} : vector<16x8xf32> to vector<16x1xf32>
    %5 = vector.extract_strided_slice %0 {offsets = [0, 4], sizes = [16, 1], strides = [1, 1]} : vector<16x8xf32> to vector<16x1xf32>
    %c0_1 = arith.constant 0 : index
    %c0_2 = arith.constant 0 : index
    %6 = vector.load %arg1[%c0_1, %c0_2] : memref<16x128xf32, #tpu.memory_space<vmem>>, vector<16x128xf32>
    %c0_3 = arith.constant 0 : index
    %c0_4 = arith.constant 0 : index
    %7 = vector.load %arg2[%c0_3, %c0_4] : memref<16x128xf32, #tpu.memory_space<vmem>>, vector<16x128xf32>
    %8 = vector.broadcast %1 : vector<16x1xf32> to vector<16x128xf32>
    %9 = arith.mulf %8, %6 : vector<16x128xf32>
    %10 = vector.broadcast %2 : vector<16x1xf32> to vector<16x128xf32>
    %11 = arith.mulf %10, %7 : vector<16x128xf32>
    %12 = arith.addf %9, %11 : vector<16x128xf32>
    %c0_5 = arith.constant 0 : index
    %c0_6 = arith.constant 0 : index
    %13 = vector.load %arg3[%c0_5, %c0_6] : memref<128x128xf32, #tpu.memory_space<vmem>>, vector<128x128xf32>
    %cst = arith.constant dense<0.000000e+00> : vector<16x128xf32>
    %14 = tpu.matmul %12, %13, %cst {dimension_numbers = #tpu.dot_dimension_numbers<[1], [0], [0], [1], [0, 0, 1, 1], [], []>} : vector<16x128xf32>, vector<128x128xf32>, vector<16x128xf32> -> vector<16x128xf32>
    %c0_7 = arith.constant 0 : index
    %c0_8 = arith.constant 0 : index
    %15 = vector.load %arg4[%c0_7, %c0_8] : memref<16x128xf32, #tpu.memory_space<vmem>>, vector<16x128xf32>
    %16 = arith.addf %14, %15 : vector<16x128xf32>
    %17 = math.tanh %16 : vector<16x128xf32>
    %c0_9 = arith.constant 0 : index
    %c0_10 = arith.constant 0 : index
    %18 = vector.load %arg5[%c0_9, %c0_10] : memref<128x128xf32, #tpu.memory_space<vmem>>, vector<128x128xf32>
    %cst_11 = arith.constant dense<0.000000e+00> : vector<16x128xf32>
    %19 = tpu.matmul %17, %18, %cst_11 {dimension_numbers = #tpu.dot_dimension_numbers<[1], [0], [0], [1], [0, 0, 1, 1], [], []>} : vector<16x128xf32>, vector<128x128xf32>, vector<16x128xf32> -> vector<16x128xf32>
    %c0_12 = arith.constant 0 : index
    %c0_13 = arith.constant 0 : index
    %20 = vector.load %arg6[%c0_12, %c0_13] : memref<1x128xf32, #tpu.memory_space<vmem>>, vector<1x128xf32>
    %21 = vector.broadcast %20 : vector<1x128xf32> to vector<16x128xf32>
    %22 = arith.addf %19, %21 : vector<16x128xf32>
    %23 = vector.broadcast %3 : vector<16x1xf32> to vector<16x128xf32>
    %24 = arith.mulf %23, %12 : vector<16x128xf32>
    %25 = vector.broadcast %4 : vector<16x1xf32> to vector<16x128xf32>
    %26 = arith.mulf %25, %22 : vector<16x128xf32>
    %27 = arith.subf %24, %26 : vector<16x128xf32>
    %28 = arith.subf %27, %6 : vector<16x128xf32>
    %29 = math.absf %28 : vector<16x128xf32>
    %30 = vector.broadcast %5 : vector<16x1xf32> to vector<16x128xf32>
    %31 = arith.mulf %29, %30 : vector<16x128xf32>
    %32 = vector.extract_strided_slice %31 {offsets = [0, 0], sizes = [8, 128], strides = [1, 1]} : vector<16x128xf32> to vector<8x128xf32>
    %33 = vector.shape_cast %32 : vector<8x128xf32> to vector<1x8x128xf32>
    %cst_14 = arith.constant dense<0.000000e+00> : vector<1xf32>
    %34 = vector.multi_reduction <add>, %33, %cst_14 [1, 2] : vector<1x8x128xf32> to vector<1xf32>
    %35 = vector.shape_cast %34 : vector<1xf32> to vector<1x1x1xf32>
    %36 = vector.extract %35[0, 0, 0] : f32 from vector<1x1x1xf32>
    %c0_15 = arith.constant 0 : index
    %37 = memref.load %arg7[%c0_15] : memref<2xf32, #tpu.memory_space<smem>>
    memref.store %36, %arg7[%c0_15] : memref<2xf32, #tpu.memory_space<smem>>
    %38 = vector.extract_strided_slice %31 {offsets = [8, 0], sizes = [8, 128], strides = [1, 1]} : vector<16x128xf32> to vector<8x128xf32>
    %39 = vector.shape_cast %38 : vector<8x128xf32> to vector<1x8x128xf32>
    %cst_16 = arith.constant dense<0.000000e+00> : vector<1xf32>
    %40 = vector.multi_reduction <add>, %39, %cst_16 [1, 2] : vector<1x8x128xf32> to vector<1xf32>
    %41 = vector.shape_cast %40 : vector<1xf32> to vector<1x1x1xf32>
    %42 = vector.extract %41[0, 0, 0] : f32 from vector<1x1x1xf32>
    %c1 = arith.constant 1 : index
    %43 = memref.load %arg7[%c1] : memref<2xf32, #tpu.memory_space<smem>>
    memref.store %42, %arg7[%c1] : memref<2xf32, #tpu.memory_space<smem>>
    %c0_17 = arith.constant 0 : index
    %c0_18 = arith.constant 0 : index
    %44 = vector.load %arg8[%c0_17, %c0_18] : memref<16x128xf32, #tpu.memory_space<vmem>>, vector<16x128xf32>
    tpu.vector_store %arg8[%c0_17, %c0_18], %22 {strides = array<i32>} : memref<16x128xf32, #tpu.memory_space<vmem>>, vector<16x128xf32>,
    %c0_19 = arith.constant 0 : index
    %c0_20 = arith.constant 0 : index
    %45 = vector.load %arg9[%c0_19, %c0_20] : memref<16x128xf32, #tpu.memory_space<vmem>>, vector<16x128xf32>
    tpu.vector_store %arg9[%c0_19, %c0_20], %27 {strides = array<i32>} : memref<16x128xf32, #tpu.memory_space<vmem>>, vector<16x128xf32>,
    return
  }
}

</mosaic_0001>

<llo_original>
// kernel: tpu_custom_call.1
$region0: #{tpu_custom_call.1}
  #allocation0 [shape = 'u32[]', space=smem, size = 0x4, offset = 0x4, fixed_abs, tag = 'smem constant byte address 0x4 - core index']
  #allocation1 [shape = 'u32[144,128]{1,0:T(1,128)}', space=vmem, size = 0x12000, scoped, tag = 'internal scratch']
  %s0 = inlined_call_operand.vmem [shape: f32[16,8], index: 0, kind: input, shape index: {}]
  %s1 = inlined_call_operand.vmem [shape: f32[16,128], index: 1, kind: input, shape index: {}]
  %s2 = inlined_call_operand.hbm [shape: f32[16,128], index: 2, kind: input, shape index: {}]
  %s3 = inlined_call_operand.hbm [shape: f32[128,128], index: 3, kind: input, shape index: {}]
  %s4 = inlined_call_operand.vmem [shape: f32[16,128], index: 4, kind: input, shape index: {}]
  %s5 = inlined_call_operand.hbm [shape: f32[128,128], index: 5, kind: input, shape index: {}]
  %s6 = inlined_call_operand.vmem [shape: f32[1,128], index: 6, kind: input, shape index: {}]
  %s7 = inlined_call_operand.hbm [shape: f32[2], index: 7, kind: output, shape index: {0}]
  %s8 = inlined_call_operand.hbm [shape: f32[16,128], index: 8, kind: output, shape index: {1}]
  %s9 = inlined_call_operand.hbm [shape: f32[16,128], index: 9, kind: output, shape index: {2}]
  %10 = xla_tuple %s7, %s8, %s9
  %s11 = sld [smem:[#allocation0]]
  $region66: #{tpu_custom_call.1} parent=0
    _
  %s13 = ssub.s32 1, %s11
  %s14 = scalar_select 0, %s13, %s11
  $region1: #{tpu_custom_call.1} parent=0
    #allocation2 [shape = 'u8[8192]{0}', space=vmem, size = 0x2000, scoped, tag = 'input window, operand 2, single buffered']
    #allocation3 [shape = 's32[1]{0}', space=sflag, size = 0x4, scoped, tag = 'scoped memory for tpu_custom_call.1']
    #allocation4 [shape = 's32[1]{0}', space=sflag, size = 0x4, scoped, tag = 'scoped memory for tpu_custom_call.1']
    #allocation5 [shape = 's32[1]{0}', space=sflag, size = 0x4, scoped, tag = 'scoped memory for tpu_custom_call.1']
    #allocation6 [shape = 'u8[65536]{0}', space=vmem, size = 0x10000, scoped, tag = 'input window, operand 3, single buffered']
    #allocation7 [shape = 's32[1]{0}', space=sflag, size = 0x4, scoped, tag = 'scoped memory for tpu_custom_call.1']
    #allocation8 [shape = 'u8[65536]{0}', space=vmem, size = 0x10000, scoped, tag = 'input window, operand 5, single buffered']
    #allocation9 [shape = 'u8[512]{0}', space=smem, size = 0x200, scoped, tag = 'output window, operand 0, single buffered']
    #allocation10 [shape = 'u8[8192]{0}', space=vmem, size = 0x2000, scoped, tag = 'output window, operand 1, single buffered']
    #allocation11 [shape = 'u8[8192]{0}', space=vmem, size = 0x2000, scoped, tag = 'output window, operand 2, single buffered']
    #allocation12 [shape = 's32[1]{0}', space=sflag, size = 0x4, scoped, tag = 'scoped memory for tpu_custom_call.1']
    %15 = vsyncpa [#allocation3], 0
    %16 = vsyncpa [#allocation7], 0
    %17 = vsyncpa [#allocation5], 0
    %18 = vsyncpa [#allocation4], 0
    %19 = vsyncpa [#allocation12], 0
    // Predicated region
    $region2: #{tpu_custom_call.1} parent=1 // pred_check
      _
    $region3: #{tpu_custom_call.1} parent=1 // pred_check_branch
      %21 = sbr.rel (0) target = $region5
    $region4: #{tpu_custom_call.1} parent=1 // pred_region
      _
    $region5: #{tpu_custom_call.1} parent=1 // pred_fallthru
      _
    // Predicated region
    $region6: #{tpu_custom_call.1} parent=1 // pred_check
      _
    $region7: #{tpu_custom_call.1} parent=1 // pred_check_branch
      %23 = sbr.rel (0) target = $region9
    $region8: #{tpu_custom_call.1} parent=1 // pred_region
      _
    $region9: #{tpu_custom_call.1} parent=1 // pred_fallthru
      _
    // Predicated region
    $region10: #{tpu_custom_call.1} parent=1 // pred_check
      _
    $region11: #{tpu_custom_call.1} parent=1 // pred_check_branch
      %25 = sbr.rel (0) target = $region13
    $region12: #{tpu_custom_call.1} parent=1 // pred_region
      %s27 = ssub.s32 256, 256
      %28 = vsyncadd [#allocation3], %s27
      %s29 = sshll.u32 [#allocation2], 4
      %s30 = int_to_ptr.vmem [resolvable:$true] %s29
      %35 = dma.hbm_to_vmem [thread:$0]  %s2, 256, %s30, [#allocation3], 128, 128, 8
    $region13: #{tpu_custom_call.1} parent=1 // pred_fallthru
      _
    // Predicated region
    $region14: #{tpu_custom_call.1} parent=1 // pred_check
      _
    $region15: #{tpu_custom_call.1} parent=1 // pred_check_branch
      %37 = sbr.rel (0) target = $region17
    $region16: #{tpu_custom_call.1} parent=1 // pred_region
      %s39 = ssub.s32 2048, 2048
      %40 = vsyncadd [#allocation7], %s39
      %s41 = sshll.u32 [#allocation6], 4
      %s42 = int_to_ptr.vmem [resolvable:$true] %s41
      %47 = dma.hbm_to_vmem [thread:$0]  %s3, 2048, %s42, [#allocation7], 128, 128, 8
    $region17: #{tpu_custom_call.1} parent=1 // pred_fallthru
      _
    // Predicated region
    $region18: #{tpu_custom_call.1} parent=1 // pred_check
      _
    $region19: #{tpu_custom_call.1} parent=1 // pred_check_branch
      %49 = sbr.rel (0) target = $region21
    $region20: #{tpu_custom_call.1} parent=1 // pred_region
      _
    $region21: #{tpu_custom_call.1} parent=1 // pred_fallthru
      _
    // Predicated region
    $region22: #{tpu_custom_call.1} parent=1 // pred_check
      _
    $region23: #{tpu_custom_call.1} parent=1 // pred_check_branch
      %51 = sbr.rel (0) target = $region25
    $region24: #{tpu_custom_call.1} parent=1 // pred_region
      %s53 = ssub.s32 2048, 2048
      %54 = vsyncadd [#allocation7], %s53
      %s55 = sshll.u32 [#allocation8], 4
      %s56 = int_to_ptr.vmem [resolvable:$true] %s55
      %61 = dma.hbm_to_vmem [thread:$0]  %s5, 2048, %s56, [#allocation7], 128, 128, 8
    $region25: #{tpu_custom_call.1} parent=1 // pred_fallthru
      _
    // Predicated region
    $region26: #{tpu_custom_call.1} parent=1 // pred_check
      _
    $region27: #{tpu_custom_call.1} parent=1 // pred_check_branch
      %63 = sbr.rel (0) target = $region29
    $region28: #{tpu_custom_call.1} parent=1 // pred_region
      _
    $region29: #{tpu_custom_call.1} parent=1 // pred_fallthru
      _
    // Predicated region
    $region30: #{tpu_custom_call.1} parent=1 // pred_check
      _
    $region31: #{tpu_custom_call.1} parent=1 // pred_check_branch
      %65 = sbr.rel (0) target = $region33
    $region32: #{tpu_custom_call.1} parent=1 // pred_region
      %66 = dma.done [#allocation3], 256
    $region33: #{tpu_custom_call.1} parent=1 // pred_fallthru
      _
    // Predicated region
    $region34: #{tpu_custom_call.1} parent=1 // pred_check
      _
    $region35: #{tpu_custom_call.1} parent=1 // pred_check_branch
      %68 = sbr.rel (0) target = $region37
    $region36: #{tpu_custom_call.1} parent=1 // pred_region
      %69 = dma.done [#allocation7], 2048
    $region37: #{tpu_custom_call.1} parent=1 // pred_fallthru
      _
    // Predicated region
    $region38: #{tpu_custom_call.1} parent=1 // pred_check
      _
    $region39: #{tpu_custom_call.1} parent=1 // pred_check_branch
      %71 = sbr.rel (0) target = $region41
    $region40: #{tpu_custom_call.1} parent=1 // pred_region
      %72 = dma.done [#allocation7], 2048
    $region41: #{tpu_custom_call.1} parent=1 // pred_fallthru
      _
    %v73 = vld [vmem:[%s0] sm:$0xff]
    %v74 = vld [vmem:[%s0 + $0x8] sm:$0xff]
    %v75 = vld [vmem:[%s1] sm:$0xff]
    %v76 = vld [vmem:[%s1 + $0x8] sm:$0xff]
    %v77 = vld [vmem:[#allocation2] sm:$0xff]
    %v78 = vld [vmem:[#allocation2 + $0x8] sm:$0xff]
    %80 = vset.pattern.permute.xlu0 0
    %81 = vperm.xlu0 %80, %v73
    %v82 = vpop.permute.xlu0 %81
    %85 = vset.pattern.permute.xlu0 0
    %86 = vperm.xlu0 %85, %v74
    %v87 = vpop.permute.xlu0 %86
    %v89 = vmul.f32 %v82, %v75
    %v90 = vmul.f32 %v87, %v76
    %91 = vset.pattern.permute.xlu0 1
    %92 = vperm.xlu0 %91, %v73
    %v93 = vpop.permute.xlu0 %92
    %95 = vset.pattern.permute.xlu0 1
    %96 = vperm.xlu0 %95, %v74
    %v97 = vpop.permute.xlu0 %96
    %v99 = vmul.f32 %v93, %v77
    %v100 = vmul.f32 %v97, %v78
    %v101 = vadd.f32 %v89, %v99
    %v102 = vadd.f32 %v90, %v100
    %v103 = vld [vmem:[#allocation6] sm:$0xff]
    %v104 = vld [vmem:[#allocation6 + $0x8] sm:$0xff]
    %v105 = vld [vmem:[#allocation6 + $0x10] sm:$0xff]
    %v106 = vld [vmem:[#allocation6 + $0x18] sm:$0xff]
    %v107 = vld [vmem:[#allocation6 + $0x20] sm:$0xff]
    %v108 = vld [vmem:[#allocation6 + $0x28] sm:$0xff]
    %v109 = vld [vmem:[#allocation6 + $0x30] sm:$0xff]
    %v110 = vld [vmem:[#allocation6 + $0x38] sm:$0xff]
    %v111 = vld [vmem:[#allocation6 + $0x40] sm:$0xff]
    %v112 = vld [vmem:[#allocation6 + $0x48] sm:$0xff]
    %v113 = vld [vmem:[#allocation6 + $0x50] sm:$0xff]
    %v114 = vld [vmem:[#allocation6 + $0x58] sm:$0xff]
    %v115 = vld [vmem:[#allocation6 + $0x60] sm:$0xff]
    %v116 = vld [vmem:[#allocation6 + $0x68] sm:$0xff]
    %v117 = vld [vmem:[#allocation6 + $0x70] sm:$0xff]
    %v118 = vld [vmem:[#allocation6 + $0x78] sm:$0xff]
    %v119 = vld [vmem:[%s4] sm:$0xff]
    %v120 = vld [vmem:[%s4 + $0x8] sm:$0xff]
    %121 = vmatprep.subr.mxu0 0.0
    %122 = vmatpush1.msra.mxu0 %v103
    %123 = vmatprep.subr.mxu0 0.0
    %124 = vmatpush1.msra.mxu0 %v104
    %125 = vmatprep.subr.mxu0 0.0
    %126 = vmatpush1.msra.mxu0 %v105
    %127 = vmatprep.subr.mxu0 0.0
    %128 = vmatpush1.msra.mxu0 %v106
    %129 = vmatprep.subr.mxu0 0.0
    %130 = vmatpush1.msra.mxu0 %v107
    %131 = vmatprep.subr.mxu0 0.0
    %132 = vmatpush1.msra.mxu0 %v108
    %133 = vmatprep.subr.mxu0 0.0
    %134 = vmatpush1.msra.mxu0 %v109
    %135 = vmatprep.subr.mxu0 0.0
    %136 = vmatpush1.msra.mxu0 %v110
    %137 = vmatprep.subr.mxu0 0.0
    %138 = vmatpush1.msra.mxu0 %v111
    %139 = vmatprep.subr.mxu0 0.0
    %140 = vmatpush1.msra.mxu0 %v112
    %141 = vmatprep.subr.mxu0 0.0
    %142 = vmatpush1.msra.mxu0 %v113
    %143 = vmatprep.subr.mxu0 0.0
    %144 = vmatpush1.msra.mxu0 %v114
    %145 = vmatprep.subr.mxu0 0.0
    %146 = vmatpush1.msra.mxu0 %v115
    %147 = vmatprep.subr.mxu0 0.0
    %148 = vmatpush1.msra.mxu0 %v116
    %149 = vmatprep.subr.mxu0 0.0
    %150 = vmatpush1.msra.mxu0 %v117
    %151 = vmatprep.subr.mxu0 0.0
    %152 = vmatpush1.msra.mxu0 %v118
    %153 = vmatprep.subr.mxu0 0.0
    %154 = vmatpush1.msra.mxu0 0.0
    %155 = vmatprep.subr.mxu0 0.0
    %156 = vmatpush1.msra.mxu0 0.0
    %157 = vmatprep.subr.mxu0 0.0
    %158 = vmatpush1.msra.mxu0 0.0
    %159 = vmatprep.subr.mxu0 0.0
    %160 = vmatpush1.msra.mxu0 0.0
    %161 = vmatprep.subr.mxu0 0.0
    %162 = vmatpush1.msra.mxu0 0.0
    %163 = vmatprep.subr.mxu0 0.0
    %164 = vmatpush1.msra.mxu0 0.0
    %165 = vmatprep.subr.mxu0 0.0
    %166 = vmatpush1.msra.mxu0 0.0
    %167 = vmatprep.subr.mxu0 0.0
    %168 = vmatpush1.msra.mxu0 0.0
    %169 = vmatprep.subr.mxu0 0.0
    %170 = vmatpush1.msra.mxu0 0.0
    %171 = vmatprep.subr.mxu0 0.0
    %172 = vmatpush1.msra.mxu0 0.0
    %173 = vmatprep.subr.mxu0 0.0
    %174 = vmatpush1.msra.mxu0 0.0
    %175 = vmatprep.subr.mxu0 0.0
    %176 = vmatpush1.msra.mxu0 0.0
    %177 = vmatprep.subr.mxu0 0.0
    %178 = vmatpush1.msra.mxu0 0.0
    %179 = vmatprep.subr.mxu0 0.0
    %180 = vmatpush1.msra.mxu0 0.0
    %181 = vmatprep.subr.mxu0 0.0
    %182 = vmatpush1.msra.mxu0 0.0
    %183 = vmatprep.subr.mxu0 0.0
    %184 = vmatpush1.msra.mxu0 0.0
    %185 = vmatprep.mubr.f32.mxu0 0.0
    %186 = vmatmul.mubr.f32.gmra.mrb[0].mxu0 %v101
    %v187 = vpop.f32.mrb[0].mxu0
    %v188 = vadd.f32 %v119, %v187
    %v189 = vpop.f32.mrb[0].mxu0
    %190 = vmatprep.mubr.f32.mxu0 0.0
    %191 = vmatmul.mubr.f32.gmra.mrb[0].mxu0 %v102
    %v192 = vpop.f32.mrb[0].mxu0
    %v193 = vadd.f32 %v120, %v192
    %v194 = vpop.f32.mrb[0].mxu0
    %195 = vdwg.mxu0
    %v196 = vtanh.pop %v188
    %v197 = vtanh.pop %v193
    %v198 = vld [vmem:[#allocation8] sm:$0xff]
    %v199 = vld [vmem:[#allocation8 + $0x8] sm:$0xff]
    %v200 = vld [vmem:[#allocation8 + $0x10] sm:$0xff]
    %v201 = vld [vmem:[#allocation8 + $0x18] sm:$0xff]
    %v202 = vld [vmem:[#allocation8 + $0x20] sm:$0xff]
    %v203 = vld [vmem:[#allocation8 + $0x28] sm:$0xff]
    %v204 = vld [vmem:[#allocation8 + $0x30] sm:$0xff]
    %v205 = vld [vmem:[#allocation8 + $0x38] sm:$0xff]
    %v206 = vld [vmem:[#allocation8 + $0x40] sm:$0xff]
    %v207 = vld [vmem:[#allocation8 + $0x48] sm:$0xff]
    %v208 = vld [vmem:[#allocation8 + $0x50] sm:$0xff]
    %v209 = vld [vmem:[#allocation8 + $0x58] sm:$0xff]
    %v210 = vld [vmem:[#allocation8 + $0x60] sm:$0xff]
    %v211 = vld [vmem:[#allocation8 + $0x68] sm:$0xff]
    %v212 = vld [vmem:[#allocation8 + $0x70] sm:$0xff]
    %v213 = vld [vmem:[#allocation8 + $0x78] sm:$0xff]
    %v214 = vld [vmem:[%s6] sm:$0x1]
    %v216 = vlaneseq
    %v217 = vshrl.u32 %v216, 7
    %v218 = vsub.s32 0, %v217
    %v219 = vrot.slane %v214, %v218
    %221 = vmatprep.subr.mxu0 0.0
    %222 = vmatpush1.msra.mxu0 %v198
    %223 = vmatprep.subr.mxu0 0.0
    %224 = vmatpush1.msra.mxu0 %v199
    %225 = vmatprep.subr.mxu0 0.0
    %226 = vmatpush1.msra.mxu0 %v200
    %227 = vmatprep.subr.mxu0 0.0
    %228 = vmatpush1.msra.mxu0 %v201
    %229 = vmatprep.subr.mxu0 0.0
    %230 = vmatpush1.msra.mxu0 %v202
    %231 = vmatprep.subr.mxu0 0.0
    %232 = vmatpush1.msra.mxu0 %v203
    %233 = vmatprep.subr.mxu0 0.0
    %234 = vmatpush1.msra.mxu0 %v204
    %235 = vmatprep.subr.mxu0 0.0
    %236 = vmatpush1.msra.mxu0 %v205
    %237 = vmatprep.subr.mxu0 0.0
    %238 = vmatpush1.msra.mxu0 %v206
    %239 = vmatprep.subr.mxu0 0.0
    %240 = vmatpush1.msra.mxu0 %v207
    %241 = vmatprep.subr.mxu0 0.0
    %242 = vmatpush1.msra.mxu0 %v208
    %243 = vmatprep.subr.mxu0 0.0
    %244 = vmatpush1.msra.mxu0 %v209
    %245 = vmatprep.subr.mxu0 0.0
    %246 = vmatpush1.msra.mxu0 %v210
    %247 = vmatprep.subr.mxu0 0.0
    %248 = vmatpush1.msra.mxu0 %v211
    %249 = vmatprep.subr.mxu0 0.0
    %250 = vmatpush1.msra.mxu0 %v212
    %251 = vmatprep.subr.mxu0 0.0
    %252 = vmatpush1.msra.mxu0 %v213
    %253 = vmatprep.subr.mxu0 0.0
    %254 = vmatpush1.msra.mxu0 0.0
    %255 = vmatprep.subr.mxu0 0.0
    %256 = vmatpush1.msra.mxu0 0.0
    %257 = vmatprep.subr.mxu0 0.0
    %258 = vmatpush1.msra.mxu0 0.0
    %259 = vmatprep.subr.mxu0 0.0
    %260 = vmatpush1.msra.mxu0 0.0
    %261 = vmatprep.subr.mxu0 0.0
    %262 = vmatpush1.msra.mxu0 0.0
    %263 = vmatprep.subr.mxu0 0.0
    %264 = vmatpush1.msra.mxu0 0.0
    %265 = vmatprep.subr.mxu0 0.0
    %266 = vmatpush1.msra.mxu0 0.0
    %267 = vmatprep.subr.mxu0 0.0
    %268 = vmatpush1.msra.mxu0 0.0
    %269 = vmatprep.subr.mxu0 0.0
    %270 = vmatpush1.msra.mxu0 0.0
    %271 = vmatprep.subr.mxu0 0.0
    %272 = vmatpush1.msra.mxu0 0.0
    %273 = vmatprep.subr.mxu0 0.0
    %274 = vmatpush1.msra.mxu0 0.0
    %275 = vmatprep.subr.mxu0 0.0
    %276 = vmatpush1.msra.mxu0 0.0
    %277 = vmatprep.subr.mxu0 0.0
    %278 = vmatpush1.msra.mxu0 0.0
    %279 = vmatprep.subr.mxu0 0.0
    %280 = vmatpush1.msra.mxu0 0.0
    %281 = vmatprep.subr.mxu0 0.0
    %282 = vmatpush1.msra.mxu0 0.0
    %283 = vmatprep.subr.mxu0 0.0
    %284 = vmatpush1.msra.mxu0 0.0
    %285 = vmatprep.mubr.f32.mxu0 0.0
    %286 = vmatmul.mubr.f32.gmra.mrb[0].mxu0 %v196
    %v287 = vpop.f32.mrb[0].mxu0
    %v288 = vadd.f32 %v219, %v287
    %v289 = vpop.f32.mrb[0].mxu0
    %290 = vmatprep.mubr.f32.mxu0 0.0
    %291 = vmatmul.mubr.f32.gmra.mrb[0].mxu0 %v197
    %v292 = vpop.f32.mrb[0].mxu0
    %v293 = vadd.f32 %v219, %v292
    %v294 = vpop.f32.mrb[0].mxu0
    %295 = vdwg.mxu0
    %296 = vset.pattern.permute.xlu0 2
    %297 = vperm.xlu0 %296, %v73
    %v298 = vpop.permute.xlu0 %297
    %300 = vset.pattern.permute.xlu0 2
    %301 = vperm.xlu0 %300, %v74
    %v302 = vpop.permute.xlu0 %301
    %v304 = vmul.f32 %v298, %v101
    %v305 = vmul.f32 %v302, %v102
    %306 = vset.pattern.permute.xlu0 3
    %307 = vperm.xlu0 %306, %v73
    %v308 = vpop.permute.xlu0 %307
    %310 = vset.pattern.permute.xlu0 3
    %311 = vperm.xlu0 %310, %v74
    %v312 = vpop.permute.xlu0 %311
    %v314 = vmul.f32 %v308, %v288
    %v315 = vmul.f32 %v312, %v293
    %v316 = vsub.f32 %v304, %v314
    %v317 = vsub.f32 %v305, %v315
    %v318 = vsub.f32 %v316, %v75
    %v319 = vsub.f32 %v317, %v76
    %v320 = vand.u32 2147483647, %v318
    %v321 = vand.u32 2147483647, %v319
    %322 = vset.pattern.permute.xlu0 4
    %323 = vperm.xlu0 %322, %v73
    %v324 = vpop.permute.xlu0 %323
    %326 = vset.pattern.permute.xlu0 4
    %327 = vperm.xlu0 %326, %v74
    %v328 = vpop.permute.xlu0 %327
    %v330 = vmul.f32 %v320, %v324
    %v331 = vmul.f32 %v321, %v328
    %332 = vadd.xlane.f32.xlu0 %v330
    %v333 = vpop.xlane.xlu0 %332
    %v334 = vrot.slane %v333, 4
    %v335 = vadd.f32 %v333, %v334
    %v336 = vrot.slane %v335, 2
    %v337 = vadd.f32 %v335, %v336
    %v338 = vrot.slane %v337, 1
    %v339 = vadd.f32 %v337, %v338
    %s340 = vtos %v339
    %s341 = scalar_lea.smem [#allocation9], 0
    %342 = sst [smem:[%s341]] %s340
    %343 = vadd.xlane.f32.xlu0 %v331
    %v344 = vpop.xlane.xlu0 %343
    %v345 = vrot.slane %v344, 4
    %v346 = vadd.f32 %v344, %v345
    %v347 = vrot.slane %v346, 2
    %v348 = vadd.f32 %v346, %v347
    %v349 = vrot.slane %v348, 1
    %v350 = vadd.f32 %v348, %v349
    %s351 = vtos %v350
    %s352 = scalar_lea.smem [#allocation9], 1
    %353 = sst [smem:[%s352]] %s351
    %354 = vst [vmem:[#allocation10] sm:$0xff] %v288
    %355 = vst [vmem:[#allocation10 + $0x8] sm:$0xff] %v293
    %356 = vst [vmem:[#allocation11] sm:$0xff] %v316
    %357 = vst [vmem:[#allocation11 + $0x8] sm:$0xff] %v317
    // Predicated region
    $region42: #{tpu_custom_call.1} parent=1 // pred_check
      _
    $region43: #{tpu_custom_call.1} parent=1 // pred_check_branch
      %359 = sbr.rel (0) target = $region45
    $region44: #{tpu_custom_call.1} parent=1 // pred_region
      %s361 = ssub.s32 16, 16
      %362 = vsyncadd [#allocation5], %s361
      %365 = dma.smem_to_hbm [#allocation9], 16, %s7, [#allocation5]
    $region45: #{tpu_custom_call.1} parent=1 // pred_fallthru
      _
    // Predicated region
    $region46: #{tpu_custom_call.1} parent=1 // pred_check
      _
    $region47: #{tpu_custom_call.1} parent=1 // pred_check_branch
      %367 = sbr.rel (0) target = $region49
    $region48: #{tpu_custom_call.1} parent=1 // pred_region
      %s369 = ssub.s32 256, 256
      %370 = vsyncadd [#allocation4], %s369
      %s371 = sshll.u32 [#allocation10], 4
      %s372 = int_to_ptr.vmem [resolvable:$true] %s371
      %377 = dma.vmem_to_hbm [thread:$0]  %s372, 256, %s8, [#allocation4], 128, 128, 8
    $region49: #{tpu_custom_call.1} parent=1 // pred_fallthru
      _
    // Predicated region
    $region50: #{tpu_custom_call.1} parent=1 // pred_check
      _
    $region51: #{tpu_custom_call.1} parent=1 // pred_check_branch
      %379 = sbr.rel (0) target = $region53
    $region52: #{tpu_custom_call.1} parent=1 // pred_region
      %s381 = ssub.s32 256, 256
      %382 = vsyncadd [#allocation12], %s381
      %s383 = sshll.u32 [#allocation11], 4
      %s384 = int_to_ptr.vmem [resolvable:$true] %s383
      %389 = dma.vmem_to_hbm [thread:$0]  %s384, 256, %s9, [#allocation12], 128, 128, 8
    $region53: #{tpu_custom_call.1} parent=1 // pred_fallthru
      _
    // Predicated region
    $region54: #{tpu_custom_call.1} parent=1 // pred_check
      _
    $region55: #{tpu_custom_call.1} parent=1 // pred_check_branch
      %391 = sbr.rel (0) target = $region57
    $region56: #{tpu_custom_call.1} parent=1 // pred_region
      %392 = dma.done [#allocation5], 16
    $region57: #{tpu_custom_call.1} parent=1 // pred_fallthru
      _
    // Predicated region
    $region58: #{tpu_custom_call.1} parent=1 // pred_check
      _
    $region59: #{tpu_custom_call.1} parent=1 // pred_check_branch
      %394 = sbr.rel (0) target = $region61
    $region60: #{tpu_custom_call.1} parent=1 // pred_region
      %395 = dma.done [#allocation4], 256
    $region61: #{tpu_custom_call.1} parent=1 // pred_fallthru
      _
    // Predicated region
    $region62: #{tpu_custom_call.1} parent=1 // pred_check
      _
    $region63: #{tpu_custom_call.1} parent=1 // pred_check_branch
      %397 = sbr.rel (0) target = $region65
    $region64: #{tpu_custom_call.1} parent=1 // pred_region
      %398 = dma.done [#allocation12], 256
    $region65: #{tpu_custom_call.1} parent=1 // pred_fallthru
      _
    %399 = sfence
    %400 = vsyncpa [#allocation3], 1
    %401 = vsyncpa [#allocation7], 1
    %402 = vsyncpa [#allocation4], 1
    %403 = vsyncpa [#allocation12], 1
    %404 = vsyncpa [#allocation5], 1

</llo_original>
